<compile_context>
chip_gen: v6e
topology: v6e:2x2x1
jax: 0.10.0
libtpu: 0.0.40
codegen_flags: <defaults>
</compile_context>

<pallas_src>
import functools

import jax
import jax.numpy as jnp
from jax import lax
from jax.experimental import pallas as pl
from jax.experimental.pallas import tpu as pltpu

EPS = 1e-5      # PyTorch BatchNorm2d default
LANES = 128
ALIGN = 16      # sublane alignment covering both f32 (8) and packed bf16 (16)


def _round_up(x, m):
    return (x + m - 1) // m * m


def _vmem_budget_bytes():
    """Scoped-VMEM budget: <= 3/4 of physical capacity, capped at 96 MiB."""
    try:
        phys = getattr(pltpu.get_tpu_info(), "vmem_capacity_bytes", None)
        if phys:
            return min(int(phys) * 3 // 4, 96 * 1024 * 1024)   # v7x ~48 MiB, v5e/v6e 96 MiB
    except Exception:
        pass
    return 48 * 1024 * 1024      # safe fallback on every generation


def _pick_row_tile(rows_mat, cin, cpad, budget_bytes, *, target=2048):
    """Matmul rows per grid step: ALIGN-multiple, footprint-aware, and small
    enough to give >= 2 grid steps (both v7x TensorCores get work)."""
    per_row = 2 * (cin * 2 + cpad * 4)              # double-buffered x(bf16) + out(f32)
    fixed = 2 * cin * cpad * 2 + 2 * cpad * 4       # weight + shift (double-buffered)
    avail = max(budget_bytes * 3 // 4 - fixed, per_row * ALIGN)
    cap = max(ALIGN, (avail // per_row) // ALIGN * ALIGN)
    half = _round_up((rows_mat + 1) // 2, ALIGN)    # >= 2 tiles whenever possible
    return max(ALIGN, min(target, cap, half))


# ---------------------------------------------------------------------------
# Kernels
# ---------------------------------------------------------------------------

def _stats_kernel(x_ref, w_ref, stats_ref):
    """Pass 1: y = x @ W (f32 accum); pack sum(y) / sum(y*y) into rows 0 / 1."""
    y = jnp.dot(x_ref[...], w_ref[...], preferred_element_type=jnp.float32)
    s = jnp.sum(y, axis=0, keepdims=True)                      # (1, Cpad)
    q = jnp.sum(y * y, axis=0, keepdims=True)                  # (1, Cpad)
    pad = jnp.zeros((6, s.shape[1]), jnp.float32)
    stats_ref[...] = jnp.concatenate([s, q, pad], axis=0)[None]


def _apply_kernel(x_ref, w_ref, shift_ref, o_ref):
    """Pass 2: y = x @ (W * bn_scale)  (scale pre-folded), then add bn shift."""
    y = jnp.dot(x_ref[...], w_ref[...], preferred_element_type=jnp.float32)
    o_ref[...] = y + shift_ref[...]


# ---------------------------------------------------------------------------
# Wrapper: Conv1x1Projection.forward
# ---------------------------------------------------------------------------

def conv1x1_projection(x_nchw, weight, gamma, beta, *, stride=2, eps=EPS):
    """x: (N, Cin, H, W) f32, weight: (Cout, Cin, 1, 1), gamma/beta: (Cout,).
    Returns BN(conv1x1_stride(x)) as (N, Cout, Ho, Wo) f32 (training-mode BN)."""
    n, cin, h, w = x_nchw.shape
    cout = weight.shape[0]
    s = stride

    # Fold the stride in the wrapper: strided slice during the (mandatory)
    # transpose/cast.  Matches PyTorch's floor((H-1)/s)+1 output size.
    xs = x_nchw[:, :, ::s, ::s]                                # (N, Cin, Ho, Wo)
    ho, wo = xs.shape[2], xs.shape[3]
    rows_mat = n * ho * wo
    cpad = _round_up(cout, LANES)

    # NCHW -> (N*Ho*Wo, Cin) bf16 MXU operand (flat rows, no in-kernel reshape).
    x2 = jnp.transpose(xs, (0, 2, 3, 1)).reshape(rows_mat, cin).astype(jnp.bfloat16)

    budget = _vmem_budget_bytes()
    tr = _pick_row_tile(rows_mat, cin, cpad, budget)
    rows_pad = _round_up(rows_mat, tr)
    if rows_pad != rows_mat:
        # Zero rows -> y == 0 -> no contribution to sum / sum-of-squares.
        x2 = jnp.pad(x2, ((0, rows_pad - rows_mat), (0, 0)))
    num_tiles = rows_pad // tr

    # (Cout, Cin, 1, 1) -> (Cin, Cpad), channel lanes zero-padded (lane-dense out).
    w_f32 = weight.reshape(cout, cin).T.astype(jnp.float32)    # (Cin, Cout)
    w_pad = jnp.zeros((cin, cpad), jnp.float32).at[:, :cout].set(w_f32)
    w_bf16 = w_pad.astype(jnp.bfloat16)

    x_spec = pl.BlockSpec((tr, cin), lambda t: (t, 0))
    w_spec = pl.BlockSpec((cin, cpad), lambda t: (0, 0))       # VMEM-resident
    cparams = pltpu.CompilerParams(
        dimension_semantics=("parallel",),
        vmem_limit_bytes=budget,
    )

    # ---- Pass 1: packed per-tile BN statistics (reduced in the wrapper) ----
    stats = pl.pallas_call(
        _stats_kernel,
        grid=(num_tiles,),
        in_specs=[x_spec, w_spec],
        out_specs=pl.BlockSpec((1, 8, cpad), lambda t: (t, 0, 0)),
        out_shape=jax.ShapeDtypeStruct((num_tiles, 8, cpad), jnp.float32),
        compiler_params=cparams,
    )(x2, w_bf16)

    # Global batch stats -> folded affine (tiny, plain jnp).
    count = float(rows_mat)
    tot = stats[:, 0, :].sum(axis=0)
    tot_sq = stats[:, 1, :].sum(axis=0)
    mean = tot / count
    var = jnp.maximum(tot_sq / count - mean * mean, 0.0)       # biased (training BN)
    g = jnp.zeros((cpad,), jnp.float32).at[:cout].set(gamma.astype(jnp.float32))
    b = jnp.zeros((cpad,), jnp.float32).at[:cout].set(beta.astype(jnp.float32))
    scale_vec = g * lax.rsqrt(var + eps)
    shift_vec = b - mean * scale_vec
    # Fold BN scale into the pass-2 weight: kernel epilogue is just y + shift.
    w_scaled = (w_pad * scale_vec[None, :]).astype(jnp.bfloat16)
    shift = shift_vec.reshape(1, cpad)

    # ---- Pass 2: conv (scale-folded) + BN shift, lane-dense f32 output ----
    # (f32 kept to match the PyTorch module; bf16 output would help v5e stores.)
    out2d = pl.pallas_call(
        _apply_kernel,
        grid=(num_tiles,),
        in_specs=[x_spec, w_spec, pl.BlockSpec((1, cpad), lambda t: (0, 0))],
        out_specs=pl.BlockSpec((tr, cpad), lambda t: (t, 0)),
        out_shape=jax.ShapeDtypeStruct((rows_pad, cpad), jnp.float32),
        compiler_params=cparams,
    )(x2, w_scaled, shift)

    out = out2d[:rows_mat, :cout].reshape(n, ho, wo, cout)     # drop row/lane padding
    return jnp.transpose(out, (0, 3, 1, 2))                    # NHWC -> NCHW


# ---------------------------------------------------------------------------
# Demo / self-check
# ---------------------------------------------------------------------------

if __name__ == "__main__":
    key = jax.random.PRNGKey(0)
    kx, kw = jax.random.split(key)

    N, Cin, H, W = 2, 4, 16, 16
    Cout, stride = 8, 2

    x = jax.random.normal(kx, (N, Cin, H, W), jnp.float32)
    # Conv2d default init (kaiming_uniform, k=1): U(-1/sqrt(Cin), 1/sqrt(Cin))
    bound = 1.0 / (Cin ** 0.5)
    weight = jax.random.uniform(kw, (Cout, Cin, 1, 1), jnp.float32, -bound, bound)
    gamma = jnp.ones((Cout,), jnp.float32)    # BatchNorm2d defaults
    beta = jnp.zeros((Cout,), jnp.float32)

    fwd = jax.jit(functools.partial(conv1x1_projection, stride=stride))
    out = jax.block_until_ready(fwd(x, weight, gamma, beta))
    assert out.shape == (N, Cout, H // stride, W // stride) and out.dtype == jnp.float32

    # Pure-JAX f32 reference: 1x1 stride-2 conv + training-mode BatchNorm.
    xs = x[:, :, ::stride, ::stride]
    y = jnp.einsum("ncij,kc->nkij", xs, weight.reshape(Cout, Cin))
    mu = y.mean(axis=(0, 2, 3), keepdims=True)
    var = y.var(axis=(0, 2, 3), keepdims=True)
    ref = (y - mu) * lax.rsqrt(var + EPS) * gamma.reshape(1, -1, 1, 1) + beta.reshape(1, -1, 1, 1)
    err = float(jnp.max(jnp.abs(out - ref)))
    assert err < 0.1, f"max abs err vs reference: {err}"

    print("KERNEL_OK")
</pallas_src>

<mosaic_0001>
module attributes {stable_mosaic.version = 11 : i64} {
  func.func @_stats_kernel(%arg0: i32, %arg1: memref<64x4xbf16, #tpu.memory_space<vmem>>, %arg2: memref<4x128xbf16, #tpu.memory_space<vmem>>, %arg3: memref<1x8x128xf32, #tpu.memory_space<vmem>>) attributes {dimension_semantics = [#tpu.dimension_semantics<parallel>], iteration_bounds = array<i64: 2>, scalar_prefetch = 0 : i64, scratch_operands = 0 : i64, tpu.core_type = #tpu.core_type<tc>, window_params = [{transform_indices = @transform_0, window_bounds = array<i64: 64, 4>}, {pipeline_mode = #tpu.pipeline_mode<synchronous>, transform_indices = @transform_1, window_bounds = array<i64: 4, 128>}, {transform_indices = @transform_2, window_bounds = array<i64: 1, 8, 128>}]} {
    %c0 = arith.constant 0 : index
    %c0_0 = arith.constant 0 : index
    %0 = vector.load %arg1[%c0, %c0_0] : memref<64x4xbf16, #tpu.memory_space<vmem>>, vector<64x4xbf16>
    %c0_1 = arith.constant 0 : index
    %c0_2 = arith.constant 0 : index
    %1 = vector.load %arg2[%c0_1, %c0_2] : memref<4x128xbf16, #tpu.memory_space<vmem>>, vector<4x128xbf16>
    %cst = arith.constant dense<0.000000e+00> : vector<64x128xf32>
    %2 = tpu.matmul %0, %1, %cst {dimension_numbers = #tpu.dot_dimension_numbers<[1], [0], [0], [1], [0, 0, 1, 1], [], []>} : vector<64x4xbf16>, vector<4x128xbf16>, vector<64x128xf32> -> vector<64x128xf32>
    %cst_3 = arith.constant dense<0.000000e+00> : vector<128xf32>
    %3 = vector.multi_reduction <add>, %2, %cst_3 [0] : vector<64x128xf32> to vector<128xf32>
    %4 = vector.shape_cast %3 : vector<128xf32> to vector<1x128xf32>
    %5 = arith.mulf %2, %2 : vector<64x128xf32>
    %cst_4 = arith.constant dense<0.000000e+00> : vector<128xf32>
    %6 = vector.multi_reduction <add>, %5, %cst_4 [0] : vector<64x128xf32> to vector<128xf32>
    %7 = vector.shape_cast %6 : vector<128xf32> to vector<1x128xf32>
    %cst_5 = arith.constant 0.000000e+00 : f32
    %8 = vector.broadcast %cst_5 : f32 to vector<6x128xf32>
    %9 = tpu.concatenate %4, %7, %8 in 0 : vector<1x128xf32>, vector<1x128xf32>, vector<6x128xf32> -> vector<8x128xf32>
    %10 = vector.shape_cast %9 : vector<8x128xf32> to vector<1x8x128xf32>
    %c0_6 = arith.constant 0 : index
    %c0_7 = arith.constant 0 : index
    %c0_8 = arith.constant 0 : index
    %11 = vector.load %arg3[%c0_6, %c0_7, %c0_8] : memref<1x8x128xf32, #tpu.memory_space<vmem>>, vector<1x8x128xf32>
    tpu.vector_store %arg3[%c0_6, %c0_7, %c0_8], %10 {strides = array<i32>} : memref<1x8x128xf32, #tpu.memory_space<vmem>>, vector<1x8x128xf32>,
    return
  }
  func.func @transform_0(%arg0: i32) -> (i32, i32) {
    %c0_i32 = arith.constant 0 : i32
    %c0_i32_0 = arith.constant 0 : i32
    return %arg0, %c0_i32 : i32, i32
  }
  func.func @transform_1(%arg0: i32) -> (i32, i32) {
    %c0_i32 = arith.constant 0 : i32
    %c0_i32_0 = arith.constant 0 : i32
    %c0_i32_1 = arith.constant 0 : i32
    return %c0_i32, %c0_i32_0 : i32, i32
  }
  func.func @transform_2(%arg0: i32) -> (i32, i32, i32) {
    %c0_i32 = arith.constant 0 : i32
    %c0_i32_0 = arith.constant 0 : i32
    %c0_i32_1 = arith.constant 0 : i32
    return %arg0, %c0_i32, %c0_i32_0 : i32, i32, i32
  }
}

module attributes {stable_mosaic.version = 11 : i64} {
  func.func @_apply_kernel(%arg0: i32, %arg1: memref<64x4xbf16, #tpu.memory_space<vmem>>, %arg2: memref<4x128xbf16, #tpu.memory_space<vmem>>, %arg3: memref<1x128xf32, #tpu.memory_space<vmem>>, %arg4: memref<64x128xf32, #tpu.memory_space<vmem>>) attributes {dimension_semantics = [#tpu.dimension_semantics<parallel>], iteration_bounds = array<i64: 2>, scalar_prefetch = 0 : i64, scratch_operands = 0 : i64, tpu.core_type = #tpu.core_type<tc>, window_params = [{transform_indices = @transform_0, window_bounds = array<i64: 64, 4>}, {pipeline_mode = #tpu.pipeline_mode<synchronous>, transform_indices = @transform_1, window_bounds = array<i64: 4, 128>}, {pipeline_mode = #tpu.pipeline_mode<synchronous>, transform_indices = @transform_2, window_bounds = array<i64: 1, 128>}, {transform_indices = @transform_3, window_bounds = array<i64: 64, 128>}]} {
    %c0 = arith.constant 0 : index
    %c0_0 = arith.constant 0 : index
    %0 = vector.load %arg1[%c0, %c0_0] : memref<64x4xbf16, #tpu.memory_space<vmem>>, vector<64x4xbf16>
    %c0_1 = arith.constant 0 : index
    %c0_2 = arith.constant 0 : index
    %1 = vector.load %arg2[%c0_1, %c0_2] : memref<4x128xbf16, #tpu.memory_space<vmem>>, vector<4x128xbf16>
    %cst = arith.constant dense<0.000000e+00> : vector<64x128xf32>
    %2 = tpu.matmul %0, %1, %cst {dimension_numbers = #tpu.dot_dimension_numbers<[1], [0], [0], [1], [0, 0, 1, 1], [], []>} : vector<64x4xbf16>, vector<4x128xbf16>, vector<64x128xf32> -> vector<64x128xf32>
    %c0_3 = arith.constant 0 : index
    %c0_4 = arith.constant 0 : index
    %3 = vector.load %arg3[%c0_3, %c0_4] : memref<1x128xf32, #tpu.memory_space<vmem>>, vector<1x128xf32>
    %4 = vector.broadcast %3 : vector<1x128xf32> to vector<64x128xf32>
    %5 = arith.addf %2, %4 : vector<64x128xf32>
    %c0_5 = arith.constant 0 : index
    %c0_6 = arith.constant 0 : index
    %6 = vector.load %arg4[%c0_5, %c0_6] : memref<64x128xf32, #tpu.memory_space<vmem>>, vector<64x128xf32>
    tpu.vector_store %arg4[%c0_5, %c0_6], %5 {strides = array<i32>} : memref<64x128xf32, #tpu.memory_space<vmem>>, vector<64x128xf32>,
    return
  }
  func.func @transform_0(%arg0: i32) -> (i32, i32) {
    %c0_i32 = arith.constant 0 : i32
    %c0_i32_0 = arith.constant 0 : i32
    return %arg0, %c0_i32 : i32, i32
  }
  func.func @transform_1(%arg0: i32) -> (i32, i32) {
    %c0_i32 = arith.constant 0 : i32
    %c0_i32_0 = arith.constant 0 : i32
    %c0_i32_1 = arith.constant 0 : i32
    return %c0_i32, %c0_i32_0 : i32, i32
  }
  func.func @transform_2(%arg0: i32) -> (i32, i32) {
    %c0_i32 = arith.constant 0 : i32
    %c0_i32_0 = arith.constant 0 : i32
    %c0_i32_1 = arith.constant 0 : i32
    return %c0_i32, %c0_i32_0 : i32, i32
  }
  func.func @transform_3(%arg0: i32) -> (i32, i32) {
    %c0_i32 = arith.constant 0 : i32
    %c0_i32_0 = arith.constant 0 : i32
    return %arg0, %c0_i32 : i32, i32
  }
}

</mosaic_0001>

<llo_original>
// kernel: conv1x1_projection.3
$region0: #{conv1x1_projection.3}
  #allocation0 [shape = 'u32[]', space=smem, size = 0x4, offset = 0x4, fixed_abs, tag = 'smem constant byte address 0x4 - core index']
  #allocation1 [shape = 'u32[144,128]{1,0:T(1,128)}', space=vmem, size = 0x12000, scoped, tag = 'internal scratch']
  %s0 = inlined_call_operand.vmem [shape: bf16[128,4], index: 0, kind: input, shape index: {}]
  %s1 = inlined_call_operand.vmem [shape: bf16[4,128], index: 1, kind: input, shape index: {}]
  %s2 = inlined_call_operand.vmem [shape: f32[1,128], index: 2, kind: input, shape index: {}]
  %s3 = inlined_call_operand.vmem [shape: f32[128,128], index: 3, kind: output, shape index: {}]
  %s4 = sld [smem:[#allocation0]]
  $region45: #{conv1x1_projection.3} parent=0
    _
  %s6 = ssub.s32 1, %s4
  %s7 = scalar_select 0, %s6, %s4
  loop: start=0, step=1, limit=4
  $region2: #{conv1x1_projection.3} parent=0 // loop_pre_header
    _
  $region3: #{conv1x1_projection.3} parent=0 // loop_header
    %s9 = sphi 0, %s13
    %p10 = scmp.ge.s32.totalorder %s9, 4
    %s19 = sphi 0, %s21
    %s22 = sphi 0, %s19
    %s23 = sphi 0, %s22
    %s39 = sphi 0, %s23
    %s43 = sphi 0, %s43
    %s45 = sphi 0, %s43
    %s46 = sphi 0, %s45
    %s60 = sphi 0, %s46
    %s64 = sphi 0, %s64
    %s66 = sphi 0, %s64
    %s67 = sphi 0, %s66
    %s81 = sphi 0, %s67
    %s87 = sphi 0, %s89
    %s90 = sphi 0, %s87
    %s91 = sphi 0, %s90
    %s107 = sphi 0, %s91
  $region4: #{conv1x1_projection.3} parent=0 // loop_header_branch
    %12 = sbr.rel (%p10) target = $region8
  $region5: #{conv1x1_projection.3} parent=0 // loop_body
    %s14 = ssub.s32 %s9, 1
    %s15 = ssub.s32 %s9, 2
    %s16 = sadd.s32 %s9, 1
    %s17 = ssub.s32 %s9, %s16
    %p18 = scmp.eq.s32.totalorder %s17, 0
    %s20 = sadd.s32 %s19, 1
    %s21 = scalar_select %p18, %s19, %s20
    %p24 = pneg %p18
    %p25 = scmp.eq.s32.totalorder %s9, 1
    %p26 = por %p24, %p25
    %p27 = scmp.ne.s32.totalorder %s19, %s22
    %p28 = scmp.eq.s32.totalorder %s9, 0
    %p29 = por %p27, %p28
    %p30 = scmp.ne.s32.totalorder %s19, %s22
    %p31 = scmp.eq.s32.totalorder %s14, 1
    %p32 = por %p30, %p31
    %p33 = scmp.ne.s32.totalorder %s22, %s23
    %p34 = scmp.eq.s32.totalorder %s14, 0
    %p35 = por %p33, %p34
    %p36 = scmp.ne.s32.totalorder %s22, %s23
    %p37 = scmp.eq.s32.totalorder %s15, 1
    %p38 = por %p36, %p37
    %p40 = scmp.ne.s32.totalorder %s23, %s39
    %p41 = scmp.eq.s32.totalorder %s15, 0
    %p42 = por %p40, %p41
    %s44 = sadd.s32 %s43, 1
    %p47 = scmp.eq.s32.totalorder %s9, 1
    %p48 = scmp.ne.s32.totalorder %s43, %s45
    %p49 = scmp.eq.s32.totalorder %s9, 0
    %p50 = por %p48, %p49
    %p51 = scmp.ne.s32.totalorder %s43, %s45
    %p52 = scmp.eq.s32.totalorder %s14, 1
    %p53 = por %p51, %p52
    %p54 = scmp.ne.s32.totalorder %s45, %s46
    %p55 = scmp.eq.s32.totalorder %s14, 0
    %p56 = por %p54, %p55
    %p57 = scmp.ne.s32.totalorder %s45, %s46
    %p58 = scmp.eq.s32.totalorder %s15, 1
    %p59 = por %p57, %p58
    %p61 = scmp.ne.s32.totalorder %s46, %s60
    %p62 = scmp.eq.s32.totalorder %s15, 0
    %p63 = por %p61, %p62
    %s65 = sadd.s32 %s64, 1
    %p68 = scmp.eq.s32.totalorder %s9, 1
    %p69 = scmp.ne.s32.totalorder %s64, %s66
    %p70 = scmp.eq.s32.totalorder %s9, 0
    %p71 = por %p69, %p70
    %p72 = scmp.ne.s32.totalorder %s64, %s66
    %p73 = scmp.eq.s32.totalorder %s14, 1
    %p74 = por %p72, %p73
    %p75 = scmp.ne.s32.totalorder %s66, %s67
    %p76 = scmp.eq.s32.totalorder %s14, 0
    %p77 = por %p75, %p76
    %p78 = scmp.ne.s32.totalorder %s66, %s67
    %p79 = scmp.eq.s32.totalorder %s15, 1
    %p80 = por %p78, %p79
    %p82 = scmp.ne.s32.totalorder %s67, %s81
    %p83 = scmp.eq.s32.totalorder %s15, 0
    %p84 = por %p82, %p83
    %s85 = ssub.s32 %s9, %s16
    %p86 = scmp.eq.s32.totalorder %s85, 0
    %s88 = sadd.s32 %s87, 1
    %s89 = scalar_select %p86, %s87, %s88
    %p92 = pneg %p86
    %p93 = scmp.eq.s32.totalorder %s9, 1
    %p94 = por %p92, %p93
    %p95 = scmp.ne.s32.totalorder %s87, %s90
    %p96 = scmp.eq.s32.totalorder %s9, 0
    %p97 = por %p95, %p96
    %p98 = scmp.ne.s32.totalorder %s87, %s90
    %p99 = scmp.eq.s32.totalorder %s14, 1
    %p100 = por %p98, %p99
    %p101 = scmp.ne.s32.totalorder %s90, %s91
    %p102 = scmp.eq.s32.totalorder %s14, 0
    %p103 = por %p101, %p102
    %p104 = scmp.ne.s32.totalorder %s90, %s91
    %p105 = scmp.eq.s32.totalorder %s15, 1
    %p106 = por %p104, %p105
    %p108 = scmp.ne.s32.totalorder %s91, %s107
    %p109 = scmp.eq.s32.totalorder %s15, 0
    %p110 = por %p108, %p109
    %p111 = scmp.le.s32.totalorder 1, %s9
    %p112 = scmp.lt.s32.totalorder %s9, 3
    %p113 = pnand %p111, %p112
    %p114 = pneg %p113
    // Predicated region
    $region9: #{conv1x1_projection.3} parent=5 // pred_check
      _
    $region10: #{conv1x1_projection.3} parent=5 // pred_check_branch
      %116 = sbr.rel (%p113) target = $region12
    $region11: #{conv1x1_projection.3} parent=5 // pred_region
      %s117 = ssub.s32 %s9, 1
      // Predicated region
      $region13: #{conv1x1_projection.3} parent=11 // pred_check
        %p118 = pneg %p56
      $region14: #{conv1x1_projection.3} parent=11 // pred_check_branch
        %120 = sbr.rel (%p118) target = $region16
      $region15: #{conv1x1_projection.3} parent=11 // pred_region
        _
      $region16: #{conv1x1_projection.3} parent=11 // pred_fallthru
        _
      // Predicated region
      $region17: #{conv1x1_projection.3} parent=11 // pred_check
        %p121 = pneg %p77
      $region18: #{conv1x1_projection.3} parent=11 // pred_check_branch
        %123 = sbr.rel (%p121) target = $region20
      $region19: #{conv1x1_projection.3} parent=11 // pred_region
        _
      $region20: #{conv1x1_projection.3} parent=11 // pred_fallthru
        _
    $region12: #{conv1x1_projection.3} parent=5 // pred_fallthru
      _
    %p124 = scmp.lt.s32.totalorder %s9, 2
    // Predicated region
    $region21: #{conv1x1_projection.3} parent=5 // pred_check
      %p125 = pneg %p124
    $region22: #{conv1x1_projection.3} parent=5 // pred_check_branch
      %127 = sbr.rel (%p125) target = $region24
    $region23: #{conv1x1_projection.3} parent=5 // pred_region
      // Predicated region
      $region25: #{conv1x1_projection.3} parent=23 // pred_check
        %p128 = pneg %p29
      $region26: #{conv1x1_projection.3} parent=23 // pred_check_branch
        %130 = sbr.rel (%p128) target = $region28
      $region27: #{conv1x1_projection.3} parent=23 // pred_region
        %s131 = smul.u32 8, %s9
        %p132 = scmp.lt.s32.totalorder %s131, 15
        %s133 = scalar_select %p132, %s131, 15
        %s134 = smul.addr %s133, 4
        %s135 = scalar_lea.vmem %s0, %s134
        %s136 = smul.u32 8, %s9
      $region28: #{conv1x1_projection.3} parent=23 // pred_fallthru
        _
    $region24: #{conv1x1_projection.3} parent=5 // pred_fallthru
      _
    %p137 = scmp.le.s32.totalorder 1, %s9
    %p138 = scmp.lt.s32.totalorder %s9, 3
    %p139 = pnand %p137, %p138
    %p140 = pneg %p139
    // Predicated region
    $region29: #{conv1x1_projection.3} parent=5 // pred_check
      _
    $region30: #{conv1x1_projection.3} parent=5 // pred_check_branch
      %142 = sbr.rel (%p139) target = $region32
    $region31: #{conv1x1_projection.3} parent=5 // pred_region
      %s143 = ssub.s32 %s9, 1
      %s144 = smul.u32 8, %s14
      %p145 = scmp.lt.s32.totalorder %s144, 15
      %s146 = scalar_select %p145, %s144, 15
      %s147 = smul.addr %s146, 4
      %s148 = scalar_lea.vmem %s0, %s147
      %p149 = pneg %p35
      %p150 = pneg %p32
      %p151 = pneg %p56
      %p152 = pneg %p53
      %p153 = pneg %p77
      %p154 = pneg %p74
      %p155 = pneg %p103
      %p156 = pneg %p100
      %s157 = smul.u32 8, %s14
      %p158 = scmp.lt.s32.totalorder %s157, 15
      %s159 = scalar_select %p158, %s157, 15
      %s160 = smul.addr %s159, 8
      %s161 = scalar_lea.vmem %s3, %s160
      %s162 = smul.u32 8, %s14
      %p163 = scmp.lt.s32.totalorder %s162, 15
      %s164 = scalar_select %p163, %s162, 15
      %s165 = smul.addr %s164, 4
      %s166 = scalar_lea.vmem %s0, %s165
      %s167 = smul.u32 8, %s14
      %s168 = smul.u32 8, %s14
      %p169 = scmp.lt.s32.totalorder %s168, 15
      %s170 = scalar_select %p169, %s168, 15
      %s171 = smul.addr %s170, 8
      %s172 = scalar_lea.vmem %s3, %s171
      %s173 = smul.u32 8, %s14
      %v175 = vld [vmem:[%s166] sm:$0xf]
      %v176 = vld [vmem:[%s166 + $0x4] sm:$0xf]
      %v177 = vld [vmem:[%s166 + $0x8] sm:$0xf]
      %v178 = vld [vmem:[%s166 + $0xc] sm:$0xf]
      %v179 = vld [vmem:[%s166 + $0x10] sm:$0xf]
      %v180 = vld [vmem:[%s166 + $0x14] sm:$0xf]
      %v181 = vld [vmem:[%s166 + $0x18] sm:$0xf]
      %v182 = vld [vmem:[%s166 + $0x1c] sm:$0xf]
      %v183 = vld [vmem:[%s1] sm:$0x3]
      %v184 = vld [vmem:[%s2] sm:$0x1]
      %v186 = vlaneseq
      %v187 = vshrl.u32 %v186, 7
      %v188 = vsub.s32 0, %v187
      %v189 = vrot.slane %v184, %v188
      %v199 = vunpack.c.l.b16 %v175
      %v200 = vunpack.c.l.b16 %v176
      %v201 = vunpack.c.l.b16 %v177
      %v202 = vunpack.c.l.b16 %v178
      %v203 = vunpack.c.l.b16 %v179
      %v204 = vunpack.c.l.b16 %v180
      %v205 = vunpack.c.l.b16 %v181
      %v206 = vunpack.c.l.b16 %v182
      %v207 = vpack.c.b16 %v200, %v199
      %v208 = vpack.c.b16 %v202, %v201
      %v209 = vpack.c.b16 %v204, %v203
      %v210 = vpack.c.b16 %v206, %v205
      %vm211 = vcmask 31744
      %v213 = vsel %vm211, %v207, 0
      %v216 = vsel %vm211, %v208, 0
      %v219 = vsel %vm211, %v209, 0
      %v222 = vsel %vm211, %v210, 0
      %vm224 = vcmask 1041408
      %v226 = vsel %vm224, %v183, 0
      %228 = vmatprep.subr.bf16.mxu0 0
      %229 = vmatpush1.bf16.msra.mxu0 0
      %230 = vmatprep.subr.bf16.mxu0 0
      %231 = vmatpush1.bf16.msra.mxu0 0
      %232 = vmatprep.subr.bf16.mxu0 0
      %233 = vmatpush1.bf16.msra.mxu0 0
      %234 = vmatprep.subr.bf16.mxu0 0
      %235 = vmatpush1.bf16.msra.mxu0 0
      %236 = vmatprep.subr.bf16.mxu0 0
      %237 = vmatpush1.bf16.msra.mxu0 0
      %238 = vmatprep.subr.bf16.mxu0 0
      %239 = vmatpush1.bf16.msra.mxu0 0
      %240 = vmatprep.subr.bf16.mxu0 0
      %241 = vmatpush1.bf16.msra.mxu0 0
      %242 = vmatprep.subr.bf16.mxu0 0
      %243 = vmatpush1.bf16.msra.mxu0 %v226
      %244 = vmatprep.subr.bf16.mxu0 0
      %245 = vmatpush2.bf16.msra.mxu0 0
      %246 = vmatprep.subr.bf16.mxu0 0
      %247 = vmatpush2.bf16.msra.mxu0 0
      %248 = vmatprep.subr.bf16.mxu0 0
      %249 = vmatpush2.bf16.msra.mxu0 0
      %250 = vmatprep.subr.bf16.mxu0 0
      %251 = vmatpush2.bf16.msra.mxu0 0
      %252 = vmatprep.subr.bf16.mxu0 0
      %253 = vmatpush2.bf16.msra.mxu0 0
      %254 = vmatprep.subr.bf16.mxu0 0
      %255 = vmatpush2.bf16.msra.mxu0 0
      %256 = vmatprep.subr.bf16.mxu0 0
      %257 = vmatpush2.bf16.msra.mxu0 0
      %258 = vmatprep.subr.bf16.mxu0 0
      %259 = vmatpush2.bf16.msra.mxu0 0
      %260 = vmatprep.mubr.bf16.mxu0 0
      %261 = vmatmul.mubr.bf16.gmra.mxu0 %v213
      %v262 = vpop.f32.mrf.mxu0
      %v263 = vadd.f32 %v189, %v262
      %v264 = vpop.f32.mrf.mxu0
      %v265 = vpop.f32.mrf.mxu0
      %v266 = vadd.f32 %v189, %v265
      %v267 = vpop.f32.mrf.mxu0
      %268 = vmatprep.mubr.bf16.mxu0 0
      %269 = vmatmul.mubr.bf16.gmra.mxu0 %v216
      %v270 = vpop.f32.mrf.mxu0
      %v271 = vadd.f32 %v189, %v270
      %v272 = vpop.f32.mrf.mxu0
      %v273 = vpop.f32.mrf.mxu0
      %v274 = vadd.f32 %v189, %v273
      %v275 = vpop.f32.mrf.mxu0
      %276 = vmatprep.mubr.bf16.mxu0 0
      %277 = vmatmul.mubr.bf16.gmra.mxu0 %v219
      %v278 = vpop.f32.mrf.mxu0
      %v279 = vadd.f32 %v189, %v278
      %v280 = vpop.f32.mrf.mxu0
      %v281 = vpop.f32.mrf.mxu0
      %v282 = vadd.f32 %v189, %v281
      %v283 = vpop.f32.mrf.mxu0
      %284 = vmatprep.mubr.bf16.mxu0 0
      %285 = vmatmul.mubr.bf16.gmra.mxu0 %v222
      %v286 = vpop.f32.mrf.mxu0
      %v287 = vadd.f32 %v189, %v286
      %v288 = vpop.f32.mrf.mxu0
      %v289 = vpop.f32.mrf.mxu0
      %v290 = vadd.f32 %v189, %v289
      %v291 = vpop.f32.mrf.mxu0
      %292 = vdwg.mxu0
      %293 = vst [vmem:[%s172] sm:$0xff] %v263
      %294 = vst [vmem:[%s172 + $0x8] sm:$0xff] %v266
      %295 = vst [vmem:[%s172 + $0x10] sm:$0xff] %v271
      %296 = vst [vmem:[%s172 + $0x18] sm:$0xff] %v274
      %297 = vst [vmem:[%s172 + $0x20] sm:$0xff] %v279
      %298 = vst [vmem:[%s172 + $0x28] sm:$0xff] %v282
      %299 = vst [vmem:[%s172 + $0x30] sm:$0xff] %v287
      %300 = vst [vmem:[%s172 + $0x38] sm:$0xff] %v290
      %s301 = smul.u32 8, %s14
      %p302 = scmp.lt.s32.totalorder %s301, 15
      %s303 = scalar_select %p302, %s301, 15
      %s304 = smul.addr %s303, 8
      %s305 = scalar_lea.vmem %s3, %s304
      // Predicated region
      $region33: #{conv1x1_projection.3} parent=31 // pred_check
        %p306 = pneg %p100
      $region34: #{conv1x1_projection.3} parent=31 // pred_check_branch
        %308 = sbr.rel (%p306) target = $region36
      $region35: #{conv1x1_projection.3} parent=31 // pred_region
        %s309 = smul.u32 8, %s14
      $region36: #{conv1x1_projection.3} parent=31 // pred_fallthru
        _
    $region32: #{conv1x1_projection.3} parent=5 // pred_fallthru
      _
    %p310 = scmp.le.s32.totalorder 2, %s9
    // Predicated region
    $region37: #{conv1x1_projection.3} parent=5 // pred_check
      %p311 = pneg %p310
    $region38: #{conv1x1_projection.3} parent=5 // pred_check_branch
      %313 = sbr.rel (%p311) target = $region40
    $region39: #{conv1x1_projection.3} parent=5 // pred_region
      %s314 = ssub.s32 %s9, 2
      // Predicated region
      $region41: #{conv1x1_projection.3} parent=39 // pred_check
        %p315 = pneg %p106
      $region42: #{conv1x1_projection.3} parent=39 // pred_check_branch
        %317 = sbr.rel (%p315) target = $region44
      $region43: #{conv1x1_projection.3} parent=39 // pred_region
        %s318 = smul.u32 8, %s15
        %p319 = scmp.lt.s32.totalorder %s318, 15
        %s320 = scalar_select %p319, %s318, 15
        %s321 = smul.addr %s320, 8
        %s322 = scalar_lea.vmem %s3, %s321
      $region44: #{conv1x1_projection.3} parent=39 // pred_fallthru
        _
    $region40: #{conv1x1_projection.3} parent=5 // pred_fallthru
      _
  $region6: #{conv1x1_projection.3} parent=0 // loop_footer
    %s13 = sadd.s32 1, %s9
  $region7: #{conv1x1_projection.3} parent=0 // loop_footer_branch
    %8 = sbr.rel target = $region3
  $region8: #{conv1x1_projection.3} parent=0 // loop_exit
    _

// kernel: conv1x1_projection.2
$region0: #{conv1x1_projection.2}
  #allocation0 [shape = 'u32[]', space=smem, size = 0x4, offset = 0x4, fixed_abs, tag = 'smem constant byte address 0x4 - core index']
  #allocation1 [shape = 'u32[144,128]{1,0:T(1,128)}', space=vmem, size = 0x12000, scoped, tag = 'internal scratch']
  %s0 = inlined_call_operand.vmem [shape: bf16[128,4], index: 0, kind: input, shape index: {}]
  %s1 = inlined_call_operand.vmem [shape: bf16[4,128], index: 1, kind: input, shape index: {}]
  %s2 = inlined_call_operand.vmem [shape: f32[2,8,128], index: 2, kind: output, shape index: {}]
  %s3 = sld [smem:[#allocation0]]
  $region41: #{conv1x1_projection.2} parent=0
    _
  %s5 = ssub.s32 1, %s3
  %s6 = scalar_select 0, %s5, %s3
  loop: start=0, step=1, limit=4
  $region2: #{conv1x1_projection.2} parent=0 // loop_pre_header
    _
  $region3: #{conv1x1_projection.2} parent=0 // loop_header
    %s8 = sphi 0, %s12
    %p9 = scmp.ge.s32.totalorder %s8, 4
    %s18 = sphi 0, %s20
    %s21 = sphi 0, %s18
    %s22 = sphi 0, %s21
    %s38 = sphi 0, %s22
    %s42 = sphi 0, %s42
    %s44 = sphi 0, %s42
    %s45 = sphi 0, %s44
    %s59 = sphi 0, %s45
    %s65 = sphi 0, %s67
    %s68 = sphi 0, %s65
    %s69 = sphi 0, %s68
    %s85 = sphi 0, %s69
  $region4: #{conv1x1_projection.2} parent=0 // loop_header_branch
    %11 = sbr.rel (%p9) target = $region8
  $region5: #{conv1x1_projection.2} parent=0 // loop_body
    %s13 = ssub.s32 %s8, 1
    %s14 = ssub.s32 %s8, 2
    %s15 = sadd.s32 %s8, 1
    %s16 = ssub.s32 %s8, %s15
    %p17 = scmp.eq.s32.totalorder %s16, 0
    %s19 = sadd.s32 %s18, 1
    %s20 = scalar_select %p17, %s18, %s19
    %p23 = pneg %p17
    %p24 = scmp.eq.s32.totalorder %s8, 1
    %p25 = por %p23, %p24
    %p26 = scmp.ne.s32.totalorder %s18, %s21
    %p27 = scmp.eq.s32.totalorder %s8, 0
    %p28 = por %p26, %p27
    %p29 = scmp.ne.s32.totalorder %s18, %s21
    %p30 = scmp.eq.s32.totalorder %s13, 1
    %p31 = por %p29, %p30
    %p32 = scmp.ne.s32.totalorder %s21, %s22
    %p33 = scmp.eq.s32.totalorder %s13, 0
    %p34 = por %p32, %p33
    %p35 = scmp.ne.s32.totalorder %s21, %s22
    %p36 = scmp.eq.s32.totalorder %s14, 1
    %p37 = por %p35, %p36
    %p39 = scmp.ne.s32.totalorder %s22, %s38
    %p40 = scmp.eq.s32.totalorder %s14, 0
    %p41 = por %p39, %p40
    %s43 = sadd.s32 %s42, 1
    %p46 = scmp.eq.s32.totalorder %s8, 1
    %p47 = scmp.ne.s32.totalorder %s42, %s44
    %p48 = scmp.eq.s32.totalorder %s8, 0
    %p49 = por %p47, %p48
    %p50 = scmp.ne.s32.totalorder %s42, %s44
    %p51 = scmp.eq.s32.totalorder %s13, 1
    %p52 = por %p50, %p51
    %p53 = scmp.ne.s32.totalorder %s44, %s45
    %p54 = scmp.eq.s32.totalorder %s13, 0
    %p55 = por %p53, %p54
    %p56 = scmp.ne.s32.totalorder %s44, %s45
    %p57 = scmp.eq.s32.totalorder %s14, 1
    %p58 = por %p56, %p57
    %p60 = scmp.ne.s32.totalorder %s45, %s59
    %p61 = scmp.eq.s32.totalorder %s14, 0
    %p62 = por %p60, %p61
    %s63 = ssub.s32 %s8, %s15
    %p64 = scmp.eq.s32.totalorder %s63, 0
    %s66 = sadd.s32 %s65, 1
    %s67 = scalar_select %p64, %s65, %s66
    %p70 = pneg %p64
    %p71 = scmp.eq.s32.totalorder %s8, 1
    %p72 = por %p70, %p71
    %p73 = scmp.ne.s32.totalorder %s65, %s68
    %p74 = scmp.eq.s32.totalorder %s8, 0
    %p75 = por %p73, %p74
    %p76 = scmp.ne.s32.totalorder %s65, %s68
    %p77 = scmp.eq.s32.totalorder %s13, 1
    %p78 = por %p76, %p77
    %p79 = scmp.ne.s32.totalorder %s68, %s69
    %p80 = scmp.eq.s32.totalorder %s13, 0
    %p81 = por %p79, %p80
    %p82 = scmp.ne.s32.totalorder %s68, %s69
    %p83 = scmp.eq.s32.totalorder %s14, 1
    %p84 = por %p82, %p83
    %p86 = scmp.ne.s32.totalorder %s69, %s85
    %p87 = scmp.eq.s32.totalorder %s14, 0
    %p88 = por %p86, %p87
    %p89 = scmp.le.s32.totalorder 1, %s8
    %p90 = scmp.lt.s32.totalorder %s8, 3
    %p91 = pnand %p89, %p90
    %p92 = pneg %p91
    // Predicated region
    $region9: #{conv1x1_projection.2} parent=5 // pred_check
      _
    $region10: #{conv1x1_projection.2} parent=5 // pred_check_branch
      %94 = sbr.rel (%p91) target = $region12
    $region11: #{conv1x1_projection.2} parent=5 // pred_region
      %s95 = ssub.s32 %s8, 1
      // Predicated region
      $region13: #{conv1x1_projection.2} parent=11 // pred_check
        %p96 = pneg %p55
      $region14: #{conv1x1_projection.2} parent=11 // pred_check_branch
        %98 = sbr.rel (%p96) target = $region16
      $region15: #{conv1x1_projection.2} parent=11 // pred_region
        _
      $region16: #{conv1x1_projection.2} parent=11 // pred_fallthru
        _
    $region12: #{conv1x1_projection.2} parent=5 // pred_fallthru
      _
    %p99 = scmp.lt.s32.totalorder %s8, 2
    // Predicated region
    $region17: #{conv1x1_projection.2} parent=5 // pred_check
      %p100 = pneg %p99
    $region18: #{conv1x1_projection.2} parent=5 // pred_check_branch
      %102 = sbr.rel (%p100) target = $region20
    $region19: #{conv1x1_projection.2} parent=5 // pred_region
      // Predicated region
      $region21: #{conv1x1_projection.2} parent=19 // pred_check
        %p103 = pneg %p28
      $region22: #{conv1x1_projection.2} parent=19 // pred_check_branch
        %105 = sbr.rel (%p103) target = $region24
      $region23: #{conv1x1_projection.2} parent=19 // pred_region
        %s106 = smul.u32 8, %s8
        %p107 = scmp.lt.s32.totalorder %s106, 15
        %s108 = scalar_select %p107, %s106, 15
        %s109 = smul.addr %s108, 4
        %s110 = scalar_lea.vmem %s0, %s109
        %s111 = smul.u32 8, %s8
      $region24: #{conv1x1_projection.2} parent=19 // pred_fallthru
        _
    $region20: #{conv1x1_projection.2} parent=5 // pred_fallthru
      _
    %p112 = scmp.le.s32.totalorder 1, %s8
    %p113 = scmp.lt.s32.totalorder %s8, 3
    %p114 = pnand %p112, %p113
    %p115 = pneg %p114
    // Predicated region
    $region25: #{conv1x1_projection.2} parent=5 // pred_check
      _
    $region26: #{conv1x1_projection.2} parent=5 // pred_check_branch
      %117 = sbr.rel (%p114) target = $region28
    $region27: #{conv1x1_projection.2} parent=5 // pred_region
      %s118 = ssub.s32 %s8, 1
      %s119 = smul.u32 8, %s13
      %p120 = scmp.lt.s32.totalorder %s119, 15
      %s121 = scalar_select %p120, %s119, 15
      %s122 = smul.addr %s121, 4
      %s123 = scalar_lea.vmem %s0, %s122
      %p124 = pneg %p34
      %p125 = pneg %p31
      %p126 = pneg %p55
      %p127 = pneg %p52
      %p128 = pneg %p81
      %p129 = pneg %p78
      %p130 = scmp.lt.s32.totalorder %s13, 1
      %s131 = scalar_select %p130, %s13, 1
      %s132 = smul.addr %s131, 8
      %s133 = scalar_lea.vmem %s2, %s132
      %s134 = smul.u32 8, %s13
      %p135 = scmp.lt.s32.totalorder %s134, 15
      %s136 = scalar_select %p135, %s134, 15
      %s137 = smul.addr %s136, 4
      %s138 = scalar_lea.vmem %s0, %s137
      %s139 = smul.u32 8, %s13
      %p140 = scmp.lt.s32.totalorder %s13, 1
      %s141 = scalar_select %p140, %s13, 1
      %s142 = smul.addr %s141, 8
      %s143 = scalar_lea.vmem %s2, %s142
      %v145 = vld [vmem:[%s138] sm:$0xf]
      %v146 = vld [vmem:[%s138 + $0x4] sm:$0xf]
      %v147 = vld [vmem:[%s138 + $0x8] sm:$0xf]
      %v148 = vld [vmem:[%s138 + $0xc] sm:$0xf]
      %v149 = vld [vmem:[%s138 + $0x10] sm:$0xf]
      %v150 = vld [vmem:[%s138 + $0x14] sm:$0xf]
      %v151 = vld [vmem:[%s138 + $0x18] sm:$0xf]
      %v152 = vld [vmem:[%s138 + $0x1c] sm:$0xf]
      %v153 = vld [vmem:[%s1] sm:$0x3]
      %v162 = vunpack.c.l.b16 %v145
      %v163 = vunpack.c.l.b16 %v146
      %v164 = vunpack.c.l.b16 %v147
      %v165 = vunpack.c.l.b16 %v148
      %v166 = vunpack.c.l.b16 %v149
      %v167 = vunpack.c.l.b16 %v150
      %v168 = vunpack.c.l.b16 %v151
      %v169 = vunpack.c.l.b16 %v152
      %v170 = vpack.c.b16 %v163, %v162
      %v171 = vpack.c.b16 %v165, %v164
      %v172 = vpack.c.b16 %v167, %v166
      %v173 = vpack.c.b16 %v169, %v168
      %vm174 = vcmask 31744
      %v176 = vsel %vm174, %v170, 0
      %v179 = vsel %vm174, %v171, 0
      %v182 = vsel %vm174, %v172, 0
      %v185 = vsel %vm174, %v173, 0
      %vm187 = vcmask 1041408
      %v189 = vsel %vm187, %v153, 0
      %191 = vmatprep.subr.bf16.mxu0 0
      %192 = vmatpush1.bf16.msra.mxu0 0
      %193 = vmatprep.subr.bf16.mxu0 0
      %194 = vmatpush1.bf16.msra.mxu0 0
      %195 = vmatprep.subr.bf16.mxu0 0
      %196 = vmatpush1.bf16.msra.mxu0 0
      %197 = vmatprep.subr.bf16.mxu0 0
      %198 = vmatpush1.bf16.msra.mxu0 0
      %199 = vmatprep.subr.bf16.mxu0 0
      %200 = vmatpush1.bf16.msra.mxu0 0
      %201 = vmatprep.subr.bf16.mxu0 0
      %202 = vmatpush1.bf16.msra.mxu0 0
      %203 = vmatprep.subr.bf16.mxu0 0
      %204 = vmatpush1.bf16.msra.mxu0 0
      %205 = vmatprep.subr.bf16.mxu0 0
      %206 = vmatpush1.bf16.msra.mxu0 %v189
      %207 = vmatprep.subr.bf16.mxu0 0
      %208 = vmatpush2.bf16.msra.mxu0 0
      %209 = vmatprep.subr.bf16.mxu0 0
      %210 = vmatpush2.bf16.msra.mxu0 0
      %211 = vmatprep.subr.bf16.mxu0 0
      %212 = vmatpush2.bf16.msra.mxu0 0
      %213 = vmatprep.subr.bf16.mxu0 0
      %214 = vmatpush2.bf16.msra.mxu0 0
      %215 = vmatprep.subr.bf16.mxu0 0
      %216 = vmatpush2.bf16.msra.mxu0 0
      %217 = vmatprep.subr.bf16.mxu0 0
      %218 = vmatpush2.bf16.msra.mxu0 0
      %219 = vmatprep.subr.bf16.mxu0 0
      %220 = vmatpush2.bf16.msra.mxu0 0
      %221 = vmatprep.subr.bf16.mxu0 0
      %222 = vmatpush2.bf16.msra.mxu0 0
      %223 = vmatprep.mubr.bf16.mxu0 0
      %224 = vmatmul.mubr.bf16.gmra.mxu0 %v176
      %v225 = vpop.f32.mrf.mxu0
      %v226 = vadd.f32 0.0, %v225
      %v227 = vpop.f32.mrf.mxu0
      %v228 = vpop.f32.mrf.mxu0
      %v229 = vadd.f32 0.0, %v228
      %v230 = vpop.f32.mrf.mxu0
      %231 = vmatprep.mubr.bf16.mxu0 0
      %232 = vmatmul.mubr.bf16.gmra.mxu0 %v179
      %v233 = vpop.f32.mrf.mxu0
      %v234 = vadd.f32 0.0, %v233
      %v235 = vpop.f32.mrf.mxu0
      %v236 = vpop.f32.mrf.mxu0
      %v237 = vadd.f32 0.0, %v236
      %v238 = vpop.f32.mrf.mxu0
      %239 = vmatprep.mubr.bf16.mxu0 0
      %240 = vmatmul.mubr.bf16.gmra.mxu0 %v182
      %v241 = vpop.f32.mrf.mxu0
      %v242 = vadd.f32 0.0, %v241
      %v243 = vpop.f32.mrf.mxu0
      %v244 = vpop.f32.mrf.mxu0
      %v245 = vadd.f32 0.0, %v244
      %v246 = vpop.f32.mrf.mxu0
      %247 = vmatprep.mubr.bf16.mxu0 0
      %248 = vmatmul.mubr.bf16.gmra.mxu0 %v185
      %v249 = vpop.f32.mrf.mxu0
      %v250 = vadd.f32 0.0, %v249
      %v251 = vpop.f32.mrf.mxu0
      %v252 = vpop.f32.mrf.mxu0
      %v253 = vadd.f32 0.0, %v252
      %v254 = vpop.f32.mrf.mxu0
      %255 = vdwg.mxu0
      %v256 = vadd.f32 %v226, %v229
      %v257 = vadd.f32 %v256, %v234
      %v258 = vadd.f32 %v257, %v237
      %v259 = vadd.f32 %v258, %v242
      %v260 = vadd.f32 %v259, %v245
      %v261 = vadd.f32 %v260, %v250
      %v262 = vadd.f32 %v261, %v253
      %v263 = vrot.slane %v262, 4
      %v264 = vadd.f32 %v262, %v263
      %v265 = vrot.slane %v264, 2
      %v266 = vadd.f32 %v264, %v265
      %v267 = vrot.slane %v266, 1
      %v268 = vadd.f32 %v266, %v267
      %v269 = vmul.f32 %v226, %v226
      %v270 = vmul.f32 %v229, %v229
      %v271 = vmul.f32 %v234, %v234
      %v272 = vmul.f32 %v237, %v237
      %v273 = vmul.f32 %v242, %v242
      %v274 = vmul.f32 %v245, %v245
      %v275 = vmul.f32 %v250, %v250
      %v276 = vmul.f32 %v253, %v253
      %v277 = vadd.f32 %v269, %v270
      %v278 = vadd.f32 %v277, %v271
      %v279 = vadd.f32 %v278, %v272
      %v280 = vadd.f32 %v279, %v273
      %v281 = vadd.f32 %v280, %v274
      %v282 = vadd.f32 %v281, %v275
      %v283 = vadd.f32 %v282, %v276
      %v284 = vrot.slane %v283, 4
      %v285 = vadd.f32 %v283, %v284
      %v286 = vrot.slane %v285, 2
      %v287 = vadd.f32 %v285, %v286
      %v288 = vrot.slane %v287, 1
      %v289 = vadd.f32 %v287, %v288
      %vm290 = vcmask 1040384
      %v291 = vsel %vm290, %v268, %v289
      %v292 = vsel %vm187, %v291, 0.0
      %293 = vst [vmem:[%s143] sm:$0xff] %v292
      %p294 = scmp.lt.s32.totalorder %s13, 1
      %s295 = scalar_select %p294, %s13, 1
      %s296 = smul.addr %s295, 8
      %s297 = scalar_lea.vmem %s2, %s296
      // Predicated region
      $region29: #{conv1x1_projection.2} parent=27 // pred_check
        %p298 = pneg %p78
      $region30: #{conv1x1_projection.2} parent=27 // pred_check_branch
        %300 = sbr.rel (%p298) target = $region32
      $region31: #{conv1x1_projection.2} parent=27 // pred_region
        _
      $region32: #{conv1x1_projection.2} parent=27 // pred_fallthru
        _
    $region28: #{conv1x1_projection.2} parent=5 // pred_fallthru
      _
    %p301 = scmp.le.s32.totalorder 2, %s8
    // Predicated region
    $region33: #{conv1x1_projection.2} parent=5 // pred_check
      %p302 = pneg %p301
    $region34: #{conv1x1_projection.2} parent=5 // pred_check_branch
      %304 = sbr.rel (%p302) target = $region36
    $region35: #{conv1x1_projection.2} parent=5 // pred_region
      %s305 = ssub.s32 %s8, 2
      // Predicated region
      $region37: #{conv1x1_projection.2} parent=35 // pred_check
        %p306 = pneg %p84
      $region38: #{conv1x1_projection.2} parent=35 // pred_check_branch
        %308 = sbr.rel (%p306) target = $region40
      $region39: #{conv1x1_projection.2} parent=35 // pred_region
        %p309 = scmp.lt.s32.totalorder %s14, 1
        %s310 = scalar_select %p309, %s14, 1
        %s311 = smul.addr %s310, 8
        %s312 = scalar_lea.vmem %s2, %s311
      $region40: #{conv1x1_projection.2} parent=35 // pred_fallthru
        _
    $region36: #{conv1x1_projection.2} parent=5 // pred_fallthru
      _
  $region6: #{conv1x1_projection.2} parent=0 // loop_footer
    %s12 = sadd.s32 1, %s8
  $region7: #{conv1x1_projection.2} parent=0 // loop_footer_branch
    %7 = sbr.rel target = $region3
  $region8: #{conv1x1_projection.2} parent=0 // loop_exit
    _

</llo_original>
